<compile_context>
chip_gen: v7x
topology: tpu7x:2x2x1
jax: 0.10.0
libtpu: 0.0.40
codegen_flags: <defaults>
</compile_context>

<pallas_src>
import math

import jax
import jax.numpy as jnp
from jax.experimental import pallas as pl
from jax.experimental.pallas import tpu as pltpu

STD = 0.01  # matches `std = 0.01` in Policy._distribution
LOGP_CONST = -math.log(STD) - 0.5 * math.log(2.0 * math.pi)
LANE = 128


def make_policy_kernel(num_hidden):
    """Kernel factory for an MLP with `num_hidden` Linear+ReLU layers followed by
    a bias-free Linear output layer.  All refs are feature-major: (features, tb)."""

    def kernel(*refs):
        obs_ref, noise_ref = refs[0], refs[1]
        w_refs = refs[2:2 + 2 * num_hidden + 1]   # w0, b0, w1, b1, ..., w_last
        out_ref = refs[-1]

        # Hidden layers: h^T = relu(W @ x^T + b).  Matmul operands are cast to the
        # weight dtype (bf16 or f32); accumulation is always f32.  N = tb fills
        # the 128-lane axis of the MXU.
        x = obs_ref[...]
        for l in range(num_hidden):
            w = w_refs[2 * l]
            b = w_refs[2 * l + 1]
            x = jnp.dot(w[...], x.astype(w.dtype),
                        preferred_element_type=jnp.float32) + b[...]
            x = jnp.maximum(x, 0.0)

        # Output layer (no bias) -> mu^T, shape (A, tb).
        w_last = w_refs[-1]
        mu = jnp.dot(w_last[...], x.astype(w_last.dtype),
                     preferred_element_type=jnp.float32)

        # Normal(mu, STD).sample() (reparameterized with externally supplied z),
        # and its log-prob.  Since act - mu == STD * z exactly:
        #   logp = -0.5*z^2 - log(STD) - 0.5*log(2*pi)
        # (depends only on z, so it issues on the VPU while the MXU is busy).
        z = noise_ref[...]                         # (A, tb)
        a_dim = z.shape[0]
        out_ref[:a_dim, :] = mu + STD * z          # act^T
        out_ref[a_dim:, :] = -0.5 * z * z + LOGP_CONST  # logp^T

    return kernel


def _batch_tiling(batch, tile_b):
    """Pick (tb, n_tiles) for the lane (batch) axis."""
    # Tiny batch: a single tile spanning the whole array (block dim == array dim
    # is legal even when it is not a multiple of 128).
    if batch <= 2 * LANE:
        return batch, 1
    # Otherwise keep the lane axis 128-dense, cap at tile_b, and prefer >= 2 grid
    # steps so the "parallel" batch axis can shard across both TensorCores on v7x.
    tb = min(tile_b, (batch + 1) // 2)
    tb = max(LANE, (tb // LANE) * LANE)
    n_tiles = -(-batch // tb)
    return tb, n_tiles


def policy_forward(obs, params, noise, *, tile_b=8192, use_bf16=True):
    """obs: (B, obs_dim) f32.  noise: (B, A) f32 (the N(0,1) draw).
    Returns (act, logp), each (B, A) f32 — same semantics as Policy.forward()."""
    B, obs_dim = obs.shape
    num_hidden = sum(1 for k in params if k.startswith("b"))
    w_last = params[f"w{num_hidden}"]
    A = w_last.shape[0]
    cd = jnp.bfloat16 if use_bf16 else jnp.float32

    # Weights feature-major (out, in), cast once; biases stay f32 as (out, 1)
    # columns so they broadcast across the lane (batch) axis.
    weight_args = []
    for l in range(num_hidden):
        weight_args.append(params[f"w{l}"].astype(cd))
        weight_args.append(params[f"b{l}"].astype(jnp.float32).reshape(-1, 1))
    weight_args.append(w_last.astype(cd))

    # Feature-major ("batch in lanes") plumbing.  In a real rollout pipeline the
    # observation/noise buffers should be stored feature-major so these
    # transposes disappear; here they are layout plumbing only.
    obs_t = obs.T          # (obs_dim, B)
    noise_t = noise.T      # (A, B)

    tb, n_tiles = _batch_tiling(B, tile_b)

    def col_spec(nrows):
        return pl.BlockSpec((nrows, tb), lambda i: (0, i))

    in_specs = [col_spec(obs_dim), col_spec(A)]
    in_specs += [pl.BlockSpec(w.shape, lambda i: (0, 0)) for w in weight_args]

    out_t = pl.pallas_call(
        make_policy_kernel(num_hidden),
        out_shape=jax.ShapeDtypeStruct((2 * A, B), jnp.float32),
        grid=(n_tiles,),
        in_specs=in_specs,
        out_specs=col_spec(2 * A),
        compiler_params=pltpu.CompilerParams(
            dimension_semantics=("parallel",)),
    )(obs_t, noise_t, *weight_args)

    act = out_t[:A, :].T
    logp = out_t[A:, :].T
    return act, logp


def reference_forward(obs, params, noise, *, use_bf16=True):
    """Plain-JAX reference in natural (batch-major) layout with the same
    cast / f32-accumulate policy as the kernel."""
    cd = jnp.bfloat16 if use_bf16 else jnp.float32
    num_hidden = sum(1 for k in params if k.startswith("b"))
    h = obs
    for l in range(num_hidden):
        w = params[f"w{l}"].astype(cd)
        h = jnp.dot(h.astype(cd), w.T,
                    preferred_element_type=jnp.float32) + params[f"b{l}"]
        h = jnp.maximum(h, 0.0)
    wl = params[f"w{num_hidden}"].astype(cd)
    mu = jnp.dot(h.astype(cd), wl.T, preferred_element_type=jnp.float32)
    act = mu + STD * noise
    logp = -0.5 * noise * noise + LOGP_CONST
    return act, logp


def init_params(key, obs_dim, hidden_dims, action_dim):
    """Deterministic init mimicking torch.nn.Linear (uniform +-1/sqrt(fan_in));
    weights are stored torch-style as (out_features, in_features)."""
    params = {}
    dims = [obs_dim] + list(hidden_dims)
    keys = jax.random.split(key, 2 * len(hidden_dims) + 1)
    ki = 0
    for i, (din, dout) in enumerate(zip(dims[:-1], dims[1:])):
        bound = 1.0 / math.sqrt(din)
        params[f"w{i}"] = jax.random.uniform(
            keys[ki], (dout, din), jnp.float32, -bound, bound); ki += 1
        params[f"b{i}"] = jax.random.uniform(
            keys[ki], (dout,), jnp.float32, -bound, bound); ki += 1
    din = dims[-1]
    bound = 1.0 / math.sqrt(din)
    params[f"w{len(hidden_dims)}"] = jax.random.uniform(
        keys[ki], (action_dim, din), jnp.float32, -bound, bound)
    # log_std parameter exists in the torch module but is unused in forward().
    params["log_std"] = -0.5 * jnp.ones((action_dim,), jnp.float32)
    return params


if __name__ == "__main__":
    OBS_DIM, ACTION_DIM = 16, 8
    HIDDEN_DIMS = [32, 32]

    key = jax.random.PRNGKey(0)
    k_param, k_obs, k_noise, k_obs2, k_noise2 = jax.random.split(key, 5)
    params = init_params(k_param, OBS_DIM, HIDDEN_DIMS, ACTION_DIM)

    # --- Small batch: single full-array tile (block dim == array dim). ---
    B = 8
    obs = jax.random.normal(k_obs, (B, OBS_DIM), jnp.float32)
    noise = jax.random.normal(k_noise, (B, ACTION_DIM), jnp.float32)
    act, logp = policy_forward(obs, params, noise)
    jax.block_until_ready((act, logp))
    act_r, logp_r = reference_forward(obs, params, noise)
    # bf16 matmul operands (f32 accumulate): allow ~bf16-ulp differences from
    # accumulation-order / rounding between the kernel and the XLA reference.
    assert jnp.allclose(act, act_r, atol=2e-3, rtol=2e-3), "small-batch act mismatch"
    assert jnp.allclose(logp, logp_r, atol=1e-6, rtol=1e-6), "small-batch logp mismatch"

    # --- Larger batch: two lane-dense 512-column tiles (exercises the pipelined
    #     grid and gives the "parallel" batch axis 2 steps for v7x's 2 TCs). ---
    B2 = 1024
    obs2 = jax.random.normal(k_obs2, (B2, OBS_DIM), jnp.float32)
    noise2 = jax.random.normal(k_noise2, (B2, ACTION_DIM), jnp.float32)
    act2, logp2 = policy_forward(obs2, params, noise2)
    jax.block_until_ready((act2, logp2))
    act2_r, logp2_r = reference_forward(obs2, params, noise2)
    assert jnp.allclose(act2, act2_r, atol=2e-3, rtol=2e-3), "large-batch act mismatch"
    assert jnp.allclose(logp2, logp2_r, atol=1e-6, rtol=1e-6), "large-batch logp mismatch"

    # --- Full-f32 matmul path: for when the ~1e-3 relative bf16 error on mu is
    #     not acceptable relative to std = 0.01 (reviewer precision concern). ---
    act3, logp3 = policy_forward(obs2, params, noise2, use_bf16=False)
    jax.block_until_ready((act3, logp3))
    act3_r, logp3_r = reference_forward(obs2, params, noise2, use_bf16=False)
    assert jnp.allclose(act3, act3_r, atol=2e-3, rtol=2e-3), "f32-path act mismatch"
    assert jnp.allclose(logp3, logp3_r, atol=1e-6, rtol=1e-6), "f32-path logp mismatch"

    print("KERNEL_OK")
</pallas_src>

<mosaic_0001>
module attributes {stable_mosaic.version = 11 : i64} {
  func.func @kernel(%arg0: i32, %arg1: memref<16x8xf32, #tpu.memory_space<vmem>>, %arg2: memref<8x8xf32, #tpu.memory_space<vmem>>, %arg3: memref<32x16xbf16, #tpu.memory_space<vmem>>, %arg4: memref<32x1xf32, #tpu.memory_space<vmem>>, %arg5: memref<32x32xbf16, #tpu.memory_space<vmem>>, %arg6: memref<32x1xf32, #tpu.memory_space<vmem>>, %arg7: memref<8x32xbf16, #tpu.memory_space<vmem>>, %arg8: memref<16x8xf32, #tpu.memory_space<vmem>>) attributes {dimension_semantics = [#tpu.dimension_semantics<parallel>], iteration_bounds = array<i64: 1>, scalar_prefetch = 0 : i64, scratch_operands = 0 : i64, tpu.core_type = #tpu.core_type<tc>, window_params = [{transform_indices = @transform_0, window_bounds = array<i64: 16, 8>}, {transform_indices = @transform_1, window_bounds = array<i64: 8, 8>}, {pipeline_mode = #tpu.pipeline_mode<synchronous>, transform_indices = @transform_2, window_bounds = array<i64: 32, 16>}, {pipeline_mode = #tpu.pipeline_mode<synchronous>, transform_indices = @transform_3, window_bounds = array<i64: 32, 1>}, {pipeline_mode = #tpu.pipeline_mode<synchronous>, transform_indices = @transform_4, window_bounds = array<i64: 32, 32>}, {pipeline_mode = #tpu.pipeline_mode<synchronous>, transform_indices = @transform_5, window_bounds = array<i64: 32, 1>}, {pipeline_mode = #tpu.pipeline_mode<synchronous>, transform_indices = @transform_6, window_bounds = array<i64: 8, 32>}, {transform_indices = @transform_7, window_bounds = array<i64: 16, 8>}]} {
    %c0 = arith.constant 0 : index
    %c0_0 = arith.constant 0 : index
    %0 = vector.load %arg1[%c0, %c0_0] : memref<16x8xf32, #tpu.memory_space<vmem>>, vector<16x8xf32>
    %c0_1 = arith.constant 0 : index
    %c0_2 = arith.constant 0 : index
    %1 = vector.load %arg3[%c0_1, %c0_2] : memref<32x16xbf16, #tpu.memory_space<vmem>>, vector<32x16xbf16>
    %2 = arith.truncf %0 : vector<16x8xf32> to vector<16x8xbf16>
    %cst = arith.constant dense<0.000000e+00> : vector<32x8xf32>
    %3 = tpu.matmul %1, %2, %cst {dimension_numbers = #tpu.dot_dimension_numbers<[1], [0], [0], [1], [0, 0, 1, 1], [], []>} : vector<32x16xbf16>, vector<16x8xbf16>, vector<32x8xf32> -> vector<32x8xf32>
    %c0_3 = arith.constant 0 : index
    %c0_4 = arith.constant 0 : index
    %4 = vector.load %arg4[%c0_3, %c0_4] : memref<32x1xf32, #tpu.memory_space<vmem>>, vector<32x1xf32>
    %5 = vector.broadcast %4 : vector<32x1xf32> to vector<32x8xf32>
    %6 = arith.addf %3, %5 : vector<32x8xf32>
    %cst_5 = arith.constant 0.000000e+00 : f32
    %7 = vector.broadcast %cst_5 : f32 to vector<32x8xf32>
    %8 = arith.maximumf %6, %7 : vector<32x8xf32>
    %c0_6 = arith.constant 0 : index
    %c0_7 = arith.constant 0 : index
    %9 = vector.load %arg5[%c0_6, %c0_7] : memref<32x32xbf16, #tpu.memory_space<vmem>>, vector<32x32xbf16>
    %10 = arith.truncf %8 : vector<32x8xf32> to vector<32x8xbf16>
    %cst_8 = arith.constant dense<0.000000e+00> : vector<32x8xf32>
    %11 = tpu.matmul %9, %10, %cst_8 {dimension_numbers = #tpu.dot_dimension_numbers<[1], [0], [0], [1], [0, 0, 1, 1], [], []>} : vector<32x32xbf16>, vector<32x8xbf16>, vector<32x8xf32> -> vector<32x8xf32>
    %c0_9 = arith.constant 0 : index
    %c0_10 = arith.constant 0 : index
    %12 = vector.load %arg6[%c0_9, %c0_10] : memref<32x1xf32, #tpu.memory_space<vmem>>, vector<32x1xf32>
    %13 = vector.broadcast %12 : vector<32x1xf32> to vector<32x8xf32>
    %14 = arith.addf %11, %13 : vector<32x8xf32>
    %cst_11 = arith.constant 0.000000e+00 : f32
    %15 = vector.broadcast %cst_11 : f32 to vector<32x8xf32>
    %16 = arith.maximumf %14, %15 : vector<32x8xf32>
    %c0_12 = arith.constant 0 : index
    %c0_13 = arith.constant 0 : index
    %17 = vector.load %arg7[%c0_12, %c0_13] : memref<8x32xbf16, #tpu.memory_space<vmem>>, vector<8x32xbf16>
    %18 = arith.truncf %16 : vector<32x8xf32> to vector<32x8xbf16>
    %cst_14 = arith.constant dense<0.000000e+00> : vector<8x8xf32>
    %19 = tpu.matmul %17, %18, %cst_14 {dimension_numbers = #tpu.dot_dimension_numbers<[1], [0], [0], [1], [0, 0, 1, 1], [], []>} : vector<8x32xbf16>, vector<32x8xbf16>, vector<8x8xf32> -> vector<8x8xf32>
    %c0_15 = arith.constant 0 : index
    %c0_16 = arith.constant 0 : index
    %20 = vector.load %arg2[%c0_15, %c0_16] : memref<8x8xf32, #tpu.memory_space<vmem>>, vector<8x8xf32>
    %cst_17 = arith.constant 0.00999999977 : f32
    %21 = vector.broadcast %cst_17 : f32 to vector<8x8xf32>
    %22 = arith.mulf %21, %20 : vector<8x8xf32>
    %23 = arith.addf %19, %22 : vector<8x8xf32>
    %c0_18 = arith.constant 0 : index
    %c0_19 = arith.constant 0 : index
    %24 = vector.load %arg8[%c0_18, %c0_19] : memref<16x8xf32, #tpu.memory_space<vmem>>, vector<8x8xf32>
    tpu.vector_store %arg8[%c0_18, %c0_19], %23 {strides = array<i32>} : memref<16x8xf32, #tpu.memory_space<vmem>>, vector<8x8xf32>,
    %cst_20 = arith.constant -5.000000e-01 : f32
    %25 = vector.broadcast %cst_20 : f32 to vector<8x8xf32>
    %26 = arith.mulf %25, %20 : vector<8x8xf32>
    %27 = arith.mulf %26, %20 : vector<8x8xf32>
    %cst_21 = arith.constant 3.68623161 : f32
    %28 = vector.broadcast %cst_21 : f32 to vector<8x8xf32>
    %29 = arith.addf %27, %28 : vector<8x8xf32>
    %c8 = arith.constant 8 : index
    %c0_22 = arith.constant 0 : index
    %30 = vector.load %arg8[%c8, %c0_22] : memref<16x8xf32, #tpu.memory_space<vmem>>, vector<8x8xf32>
    tpu.vector_store %arg8[%c8, %c0_22], %29 {strides = array<i32>} : memref<16x8xf32, #tpu.memory_space<vmem>>, vector<8x8xf32>,
    return
  }
  func.func @transform_0(%arg0: i32) -> (i32, i32) {
    %c0_i32 = arith.constant 0 : i32
    %c0_i32_0 = arith.constant 0 : i32
    return %c0_i32, %arg0 : i32, i32
  }
  func.func @transform_1(%arg0: i32) -> (i32, i32) {
    %c0_i32 = arith.constant 0 : i32
    %c0_i32_0 = arith.constant 0 : i32
    return %c0_i32, %arg0 : i32, i32
  }
  func.func @transform_2(%arg0: i32) -> (i32, i32) {
    %c0_i32 = arith.constant 0 : i32
    %c0_i32_0 = arith.constant 0 : i32
    %c0_i32_1 = arith.constant 0 : i32
    return %c0_i32, %c0_i32_0 : i32, i32
  }
  func.func @transform_3(%arg0: i32) -> (i32, i32) {
    %c0_i32 = arith.constant 0 : i32
    %c0_i32_0 = arith.constant 0 : i32
    %c0_i32_1 = arith.constant 0 : i32
    return %c0_i32, %c0_i32_0 : i32, i32
  }
  func.func @transform_4(%arg0: i32) -> (i32, i32) {
    %c0_i32 = arith.constant 0 : i32
    %c0_i32_0 = arith.constant 0 : i32
    %c0_i32_1 = arith.constant 0 : i32
    return %c0_i32, %c0_i32_0 : i32, i32
  }
  func.func @transform_5(%arg0: i32) -> (i32, i32) {
    %c0_i32 = arith.constant 0 : i32
    %c0_i32_0 = arith.constant 0 : i32
    %c0_i32_1 = arith.constant 0 : i32
    return %c0_i32, %c0_i32_0 : i32, i32
  }
  func.func @transform_6(%arg0: i32) -> (i32, i32) {
    %c0_i32 = arith.constant 0 : i32
    %c0_i32_0 = arith.constant 0 : i32
    %c0_i32_1 = arith.constant 0 : i32
    return %c0_i32, %c0_i32_0 : i32, i32
  }
  func.func @transform_7(%arg0: i32) -> (i32, i32) {
    %c0_i32 = arith.constant 0 : i32
    %c0_i32_0 = arith.constant 0 : i32
    return %c0_i32, %arg0 : i32, i32
  }
}

</mosaic_0001>

<llo_original>
// kernel: tpu_custom_call.1
$region0: #{tpu_custom_call.1}
  #allocation0 [shape = 'u32[]', space=smem, size = 0x4, offset = 0x4, fixed_abs, tag = 'smem constant byte address 0x4 - core index']
  #allocation1 [shape = 'u32[144,128]{1,0:T(1,128)}', space=vmem, size = 0x12000, scoped, tag = 'internal scratch']
  %s0 = inlined_call_operand.vmem [shape: f32[16,8], index: 0, kind: input, shape index: {}]
  %s1 = inlined_call_operand.vmem [shape: f32[8,8], index: 1, kind: input, shape index: {}]
  %s2 = inlined_call_operand.vmem [shape: bf16[32,16], index: 2, kind: input, shape index: {}]
  %s3 = inlined_call_operand.vmem [shape: f32[32,1], index: 3, kind: input, shape index: {}]
  %s4 = inlined_call_operand.vmem [shape: bf16[32,32], index: 4, kind: input, shape index: {}]
  %s5 = inlined_call_operand.vmem [shape: f32[32,1], index: 5, kind: input, shape index: {}]
  %s6 = inlined_call_operand.vmem [shape: bf16[8,32], index: 6, kind: input, shape index: {}]
  %s7 = inlined_call_operand.vmem [shape: f32[16,8], index: 7, kind: output, shape index: {}]
  %s8 = sld [smem:[#allocation0]]
  $region38: #{tpu_custom_call.1} parent=0
    _
  %s10 = ssub.s32 1, %s8
  %s11 = scalar_select 0, %s10, %s8
  // Predicated region
  $region2: #{tpu_custom_call.1} parent=0 // pred_check
    _
  $region3: #{tpu_custom_call.1} parent=0 // pred_check_branch
    %13 = sbr.rel (0) target = $region5
  $region4: #{tpu_custom_call.1} parent=0 // pred_region
    _
  $region5: #{tpu_custom_call.1} parent=0 // pred_fallthru
    _
  // Predicated region
  $region6: #{tpu_custom_call.1} parent=0 // pred_check
    _
  $region7: #{tpu_custom_call.1} parent=0 // pred_check_branch
    %15 = sbr.rel (0) target = $region9
  $region8: #{tpu_custom_call.1} parent=0 // pred_region
    _
  $region9: #{tpu_custom_call.1} parent=0 // pred_fallthru
    _
  // Predicated region
  $region10: #{tpu_custom_call.1} parent=0 // pred_check
    _
  $region11: #{tpu_custom_call.1} parent=0 // pred_check_branch
    %17 = sbr.rel (0) target = $region13
  $region12: #{tpu_custom_call.1} parent=0 // pred_region
    _
  $region13: #{tpu_custom_call.1} parent=0 // pred_fallthru
    _
  // Predicated region
  $region14: #{tpu_custom_call.1} parent=0 // pred_check
    _
  $region15: #{tpu_custom_call.1} parent=0 // pred_check_branch
    %19 = sbr.rel (0) target = $region17
  $region16: #{tpu_custom_call.1} parent=0 // pred_region
    _
  $region17: #{tpu_custom_call.1} parent=0 // pred_fallthru
    _
  // Predicated region
  $region18: #{tpu_custom_call.1} parent=0 // pred_check
    _
  $region19: #{tpu_custom_call.1} parent=0 // pred_check_branch
    %21 = sbr.rel (0) target = $region21
  $region20: #{tpu_custom_call.1} parent=0 // pred_region
    _
  $region21: #{tpu_custom_call.1} parent=0 // pred_fallthru
    _
  // Predicated region
  $region22: #{tpu_custom_call.1} parent=0 // pred_check
    _
  $region23: #{tpu_custom_call.1} parent=0 // pred_check_branch
    %23 = sbr.rel (0) target = $region25
  $region24: #{tpu_custom_call.1} parent=0 // pred_region
    _
  $region25: #{tpu_custom_call.1} parent=0 // pred_fallthru
    _
  // Predicated region
  $region26: #{tpu_custom_call.1} parent=0 // pred_check
    _
  $region27: #{tpu_custom_call.1} parent=0 // pred_check_branch
    %25 = sbr.rel (0) target = $region29
  $region28: #{tpu_custom_call.1} parent=0 // pred_region
    _
  $region29: #{tpu_custom_call.1} parent=0 // pred_fallthru
    _
  %v27 = vld [vmem:[%s0] sm:$0xff]
  %v28 = vld [vmem:[%s0 + $0x8] sm:$0xff]
  %v29 = vld [vmem:[%s2] sm:$0xf]
  %v30 = vld [vmem:[%s2 + $0x4] sm:$0xf]
  %v31 = vld [vmem:[%s2 + $0x8] sm:$0xf]
  %v32 = vld [vmem:[%s2 + $0xc] sm:$0xf]
  %v33 = vpack.c.bf16 %v28, %v27
  %v34 = vld [vmem:[%s3] sm:$0xff]
  %v35 = vld [vmem:[%s3 + $0x8] sm:$0xff]
  %v36 = vld [vmem:[%s3 + $0x10] sm:$0xff]
  %v37 = vld [vmem:[%s3 + $0x18] sm:$0xff]
  %39 = vset.pattern.permute.xlu0 0
  %40 = vperm.xlu0 %39, %v34
  %v41 = vpop.permute.xlu0 %40
  %44 = vset.pattern.permute.xlu0 0
  %45 = vperm.xlu0 %44, %v35
  %v46 = vpop.permute.xlu0 %45
  %49 = vset.pattern.permute.xlu0 0
  %50 = vperm.xlu0 %49, %v36
  %v51 = vpop.permute.xlu0 %50
  %54 = vset.pattern.permute.xlu0 0
  %55 = vperm.xlu0 %54, %v37
  %v56 = vpop.permute.xlu0 %55
  %v62 = vunpack.c.l.b16 %v29
  %v63 = vunpack.c.l.b16 %v30
  %v64 = vunpack.c.l.b16 %v31
  %v65 = vunpack.c.l.b16 %v32
  %v66 = vpack.c.b16 %v63, %v62
  %v67 = vpack.c.b16 %v65, %v64
  %vm68 = vcmask 130048
  %v70 = vsel %vm68, %v66, 0
  %v73 = vsel %vm68, %v67, 0
  %75 = vmatprep.subr.bf16.mxu0 0
  %76 = vmatpush1.bf16.msra.mxu0 %v33
  %77 = vmatprep.subr.bf16.mxu0 0
  %78 = vmatpush1.bf16.msra.mxu0 0
  %79 = vmatprep.subr.bf16.mxu0 0
  %80 = vmatpush1.bf16.msra.mxu0 0
  %81 = vmatprep.subr.bf16.mxu0 0
  %82 = vmatpush1.bf16.msra.mxu0 0
  %83 = vmatprep.subr.bf16.mxu0 0
  %84 = vmatpush1.bf16.msra.mxu0 0
  %85 = vmatprep.subr.bf16.mxu0 0
  %86 = vmatpush1.bf16.msra.mxu0 0
  %87 = vmatprep.subr.bf16.mxu0 0
  %88 = vmatpush1.bf16.msra.mxu0 0
  %89 = vmatprep.subr.bf16.mxu0 0
  %90 = vmatpush1.bf16.msra.mxu0 0
  %91 = vmatprep.subr.bf16.mxu0 0
  %92 = vmatpush1.bf16.msra.mxu0 0
  %93 = vmatprep.subr.bf16.mxu0 0
  %94 = vmatpush1.bf16.msra.mxu0 0
  %95 = vmatprep.subr.bf16.mxu0 0
  %96 = vmatpush1.bf16.msra.mxu0 0
  %97 = vmatprep.subr.bf16.mxu0 0
  %98 = vmatpush1.bf16.msra.mxu0 0
  %99 = vmatprep.subr.bf16.mxu0 0
  %100 = vmatpush1.bf16.msra.mxu0 0
  %101 = vmatprep.subr.bf16.mxu0 0
  %102 = vmatpush1.bf16.msra.mxu0 0
  %103 = vmatprep.subr.bf16.mxu0 0
  %104 = vmatpush1.bf16.msra.mxu0 0
  %105 = vmatprep.subr.bf16.mxu0 0
  %106 = vmatpush1.bf16.msra.mxu0 0
  %107 = vmatprep.mubr.bf16.mxu0 0
  %108 = vmatmul.mubr.bf16.gmra.mrb[0].mxu0 %v70
  %v109 = vpop.f32.mrb[0].mxu0
  %v110 = vadd.f32 %v41, %v109
  %v111 = vpop.f32.mrb[0].mxu0
  %v112 = vpop.f32.mrb[0].mxu0
  %v113 = vadd.f32 %v46, %v112
  %v114 = vpop.f32.mrb[0].mxu0
  %115 = vmatprep.mubr.bf16.mxu0 0
  %116 = vmatmul.mubr.bf16.gmra.mrb[0].mxu0 %v73
  %v117 = vpop.f32.mrb[0].mxu0
  %v118 = vadd.f32 %v51, %v117
  %v119 = vpop.f32.mrb[0].mxu0
  %v120 = vpop.f32.mrb[0].mxu0
  %v121 = vadd.f32 %v56, %v120
  %v122 = vpop.f32.mrb[0].mxu0
  %123 = vdwg.mxu0
  %v124 = vmax.f32 %v110, 0.0
  %v125 = vmax.f32 %v113, 0.0
  %v126 = vmax.f32 %v118, 0.0
  %v127 = vmax.f32 %v121, 0.0
  %v128 = vld [vmem:[%s4] sm:$0xf]
  %v129 = vld [vmem:[%s4 + $0x4] sm:$0xf]
  %v130 = vld [vmem:[%s4 + $0x8] sm:$0xf]
  %v131 = vld [vmem:[%s4 + $0xc] sm:$0xf]
  %v132 = vpack.c.bf16 %v125, %v124
  %v133 = vpack.c.bf16 %v127, %v126
  %v134 = vld [vmem:[%s5] sm:$0xff]
  %v135 = vld [vmem:[%s5 + $0x8] sm:$0xff]
  %v136 = vld [vmem:[%s5 + $0x10] sm:$0xff]
  %v137 = vld [vmem:[%s5 + $0x18] sm:$0xff]
  %139 = vset.pattern.permute.xlu0 0
  %140 = vperm.xlu0 %139, %v134
  %v141 = vpop.permute.xlu0 %140
  %144 = vset.pattern.permute.xlu0 0
  %145 = vperm.xlu0 %144, %v135
  %v146 = vpop.permute.xlu0 %145
  %149 = vset.pattern.permute.xlu0 0
  %150 = vperm.xlu0 %149, %v136
  %v151 = vpop.permute.xlu0 %150
  %154 = vset.pattern.permute.xlu0 0
  %155 = vperm.xlu0 %154, %v137
  %v156 = vpop.permute.xlu0 %155
  %v162 = vunpack.c.l.b16 %v128
  %v163 = vunpack.c.l.b16 %v129
  %v164 = vunpack.c.l.b16 %v130
  %v165 = vunpack.c.l.b16 %v131
  %v166 = vpack.c.b16 %v163, %v162
  %v167 = vpack.c.b16 %v165, %v164
  %vm168 = vcmask 261120
  %v170 = vsel %vm168, %v166, 0
  %v173 = vsel %vm168, %v167, 0
  %175 = vmatprep.subr.bf16.mxu0 0
  %176 = vmatpush1.bf16.msra.mxu0 %v132
  %177 = vmatprep.subr.bf16.mxu0 0
  %178 = vmatpush1.bf16.msra.mxu0 %v133
  %179 = vmatprep.subr.bf16.mxu0 0
  %180 = vmatpush1.bf16.msra.mxu0 0
  %181 = vmatprep.subr.bf16.mxu0 0
  %182 = vmatpush1.bf16.msra.mxu0 0
  %183 = vmatprep.subr.bf16.mxu0 0
  %184 = vmatpush1.bf16.msra.mxu0 0
  %185 = vmatprep.subr.bf16.mxu0 0
  %186 = vmatpush1.bf16.msra.mxu0 0
  %187 = vmatprep.subr.bf16.mxu0 0
  %188 = vmatpush1.bf16.msra.mxu0 0
  %189 = vmatprep.subr.bf16.mxu0 0
  %190 = vmatpush1.bf16.msra.mxu0 0
  %191 = vmatprep.subr.bf16.mxu0 0
  %192 = vmatpush1.bf16.msra.mxu0 0
  %193 = vmatprep.subr.bf16.mxu0 0
  %194 = vmatpush1.bf16.msra.mxu0 0
  %195 = vmatprep.subr.bf16.mxu0 0
  %196 = vmatpush1.bf16.msra.mxu0 0
  %197 = vmatprep.subr.bf16.mxu0 0
  %198 = vmatpush1.bf16.msra.mxu0 0
  %199 = vmatprep.subr.bf16.mxu0 0
  %200 = vmatpush1.bf16.msra.mxu0 0
  %201 = vmatprep.subr.bf16.mxu0 0
  %202 = vmatpush1.bf16.msra.mxu0 0
  %203 = vmatprep.subr.bf16.mxu0 0
  %204 = vmatpush1.bf16.msra.mxu0 0
  %205 = vmatprep.subr.bf16.mxu0 0
  %206 = vmatpush1.bf16.msra.mxu0 0
  %207 = vmatprep.mubr.bf16.mxu0 0
  %208 = vmatmul.mubr.bf16.gmra.mrb[0].mxu0 %v170
  %v209 = vpop.f32.mrb[0].mxu0
  %v210 = vadd.f32 %v141, %v209
  %v211 = vpop.f32.mrb[0].mxu0
  %v212 = vpop.f32.mrb[0].mxu0
  %v213 = vadd.f32 %v146, %v212
  %v214 = vpop.f32.mrb[0].mxu0
  %215 = vmatprep.mubr.bf16.mxu0 0
  %216 = vmatmul.mubr.bf16.gmra.mrb[0].mxu0 %v173
  %v217 = vpop.f32.mrb[0].mxu0
  %v218 = vadd.f32 %v151, %v217
  %v219 = vpop.f32.mrb[0].mxu0
  %v220 = vpop.f32.mrb[0].mxu0
  %v221 = vadd.f32 %v156, %v220
  %v222 = vpop.f32.mrb[0].mxu0
  %223 = vdwg.mxu0
  %v224 = vmax.f32 %v210, 0.0
  %v225 = vmax.f32 %v213, 0.0
  %v226 = vmax.f32 %v218, 0.0
  %v227 = vmax.f32 %v221, 0.0
  %v228 = vld [vmem:[%s6] sm:$0xf]
  %v229 = vpack.c.bf16 %v225, %v224
  %v230 = vpack.c.bf16 %v227, %v226
  %v231 = vld [vmem:[%s1] sm:$0xff]
  %v232 = vmul.f32 %v231, 0.01
  %v234 = vsel %vm168, %v228, 0
  %236 = vmatprep.subr.bf16.mxu0 0
  %237 = vmatpush1.bf16.msra.mxu0 %v229
  %238 = vmatprep.subr.bf16.mxu0 0
  %239 = vmatpush1.bf16.msra.mxu0 %v230
  %240 = vmatprep.subr.bf16.mxu0 0
  %241 = vmatpush1.bf16.msra.mxu0 0
  %242 = vmatprep.subr.bf16.mxu0 0
  %243 = vmatpush1.bf16.msra.mxu0 0
  %244 = vmatprep.subr.bf16.mxu0 0
  %245 = vmatpush1.bf16.msra.mxu0 0
  %246 = vmatprep.subr.bf16.mxu0 0
  %247 = vmatpush1.bf16.msra.mxu0 0
  %248 = vmatprep.subr.bf16.mxu0 0
  %249 = vmatpush1.bf16.msra.mxu0 0
  %250 = vmatprep.subr.bf16.mxu0 0
  %251 = vmatpush1.bf16.msra.mxu0 0
  %252 = vmatprep.subr.bf16.mxu0 0
  %253 = vmatpush1.bf16.msra.mxu0 0
  %254 = vmatprep.subr.bf16.mxu0 0
  %255 = vmatpush1.bf16.msra.mxu0 0
  %256 = vmatprep.subr.bf16.mxu0 0
  %257 = vmatpush1.bf16.msra.mxu0 0
  %258 = vmatprep.subr.bf16.mxu0 0
  %259 = vmatpush1.bf16.msra.mxu0 0
  %260 = vmatprep.subr.bf16.mxu0 0
  %261 = vmatpush1.bf16.msra.mxu0 0
  %262 = vmatprep.subr.bf16.mxu0 0
  %263 = vmatpush1.bf16.msra.mxu0 0
  %264 = vmatprep.subr.bf16.mxu0 0
  %265 = vmatpush1.bf16.msra.mxu0 0
  %266 = vmatprep.subr.bf16.mxu0 0
  %267 = vmatpush1.bf16.msra.mxu0 0
  %268 = vmatprep.mubr.bf16.mxu0 0
  %269 = vmatmul.mubr.bf16.gmra.mrb[0].mxu0 %v234
  %v270 = vpop.f32.mrb[0].mxu0
  %v271 = vadd.f32 %v232, %v270
  %v272 = vpop.f32.mrb[0].mxu0
  %v273 = vpop.f32.mrb[0].mxu0
  %v274 = vpop.f32.mrb[0].mxu0
  %275 = vdwg.mxu0
  %vm276 = vcmask 64512
  %277 = vst.msk [vmem:[%s7] sm:$0xff] %vm276, %v271
  %v278 = vmul.f32 %v231, -0.5
  %v279 = vmul.f32 %v278, %v231
  %v280 = vadd.f32 %v279, 3.6862316
  %281 = vst.msk [vmem:[%s7 + $0x8] sm:$0xff] %vm276, %v280
  // Predicated region
  $region30: #{tpu_custom_call.1} parent=0 // pred_check
    _
  $region31: #{tpu_custom_call.1} parent=0 // pred_check_branch
    %283 = sbr.rel (0) target = $region33
  $region32: #{tpu_custom_call.1} parent=0 // pred_region
    _
  $region33: #{tpu_custom_call.1} parent=0 // pred_fallthru
    _
  // Predicated region
  $region34: #{tpu_custom_call.1} parent=0 // pred_check
    _
  $region35: #{tpu_custom_call.1} parent=0 // pred_check_branch
    %285 = sbr.rel (0) target = $region37
  $region36: #{tpu_custom_call.1} parent=0 // pred_region
    _
  $region37: #{tpu_custom_call.1} parent=0 // pred_fallthru
    _

</llo_original>
